<compile_context>
chip_gen: v6e
topology: v6e:2x2x1
jax: 0.10.0
libtpu: 0.0.40
codegen_flags: <defaults>
</compile_context>

<pallas_src>
import functools

import jax
import jax.numpy as jnp
from jax import lax
from jax.experimental import pallas as pl
from jax.experimental.pallas import tpu as pltpu

_IGNORE = 255.0
_LANE = 128
_SUB = 8


def _pick_subrows(br):
    """Largest divisor of `br` that is <= 1024 (bounds in-kernel temporaries)."""
    if br <= 1024:
        return br
    for s in (1024, 512, 256, 128, 64, 32, 16, 8):
        if br % s == 0:
            return s
    return br


def _dice_kernel(p_ref, t_ref, out_ref, acc_a, acc_b, acc_c, *,
                 nbk, nb, br, sub, rows_last, has_dummy, has_partial):
    c = pl.program_id(0)   # chunk index (one per TensorCore on megacore parts)
    k = pl.program_id(1)   # block index within the chunk (reduction axis)

    @pl.when(k == 0)
    def _():
        acc_a[...] = jnp.zeros_like(acc_a)
        acc_b[...] = jnp.zeros_like(acc_b)
        acc_c[...] = jnp.zeros_like(acc_c)

    blk = c * nbk + k           # linear block index; >= nb only on dummy steps
    n_sub = br // sub           # static

    def _accumulate(p, t, keep):
        pv = jnp.where(keep, p, 0.0)
        tv = jnp.where(keep, t, 0.0)
        if sub % _SUB == 0:
            shp = (sub // _SUB, _SUB, _LANE)
            acc_a[...] += jnp.sum((pv * tv).reshape(shp), axis=0)
            acc_b[...] += jnp.sum((pv * pv).reshape(shp), axis=0)
            acc_c[...] += jnp.sum((tv * tv).reshape(shp), axis=0)
        else:  # tiny-array fallback (block has fewer than 8 rows)
            acc_a[0:1, :] += jnp.sum(pv * tv, axis=0, keepdims=True)
            acc_b[0:1, :] += jnp.sum(pv * pv, axis=0, keepdims=True)
            acc_c[0:1, :] += jnp.sum(tv * tv, axis=0, keepdims=True)

    def _process_block(mask_rows):
        @pl.loop(0, n_sub)
        def _(s):
            off = pl.multiple_of(s * sub, sub)
            p = p_ref[pl.ds(off, sub), :].astype(jnp.float32)
            t = t_ref[pl.ds(off, sub), :].astype(jnp.float32)
            keep = t != _IGNORE
            if mask_rows:
                rows = off + lax.broadcasted_iota(jnp.int32, (sub, _LANE), 0)
                keep = jnp.logical_and(keep, rows < rows_last)
            _accumulate(p, t, keep)

    if has_partial:
        is_edge = blk == nb - 1
        full_ok = jnp.logical_not(is_edge)
        if has_dummy:
            full_ok = jnp.logical_and(full_ok, blk < nb)

        @pl.when(full_ok)
        def _():
            _process_block(False)

        @pl.when(is_edge)          # masked path only for the one partial block
        def _():
            _process_block(True)
    elif has_dummy:
        @pl.when(blk < nb)
        def _():
            _process_block(False)
    else:
        _process_block(False)

    @pl.when(k == nbk - 1)
    def _():
        out_ref[0, 0, :, :] = acc_a[...]
        out_ref[0, 1, :, :] = acc_b[...]
        out_ref[0, 2, :, :] = acc_c[...]


def _dice_partial_sums(flat_p, flat_t, total_main, *, block_rows):
    """(a, b, c) partial sums over the first `total_main` (128-aligned) elems."""
    m_rows = total_main // _LANE
    if total_main != flat_p.shape[0]:
        flat_p = flat_p[:total_main]
        flat_t = flat_t[:total_main]
    p2 = flat_p.reshape(m_rows, _LANE)   # free reshape, native dtype preserved
    t2 = flat_t.reshape(m_rows, _LANE)

    block_rows = max(_SUB, (int(block_rows) // _SUB) * _SUB)
    if m_rows >= _SUB:
        br = min(block_rows, (m_rows // _SUB) * _SUB)
    else:
        br = m_rows                      # full-dim block for tiny inputs
    nb = -(-m_rows // br)                # cdiv
    num_chunks = 2 if nb >= 2 else 1     # one chunk per TensorCore on v7x
    nbk = -(-nb // num_chunks)
    has_dummy = num_chunks * nbk > nb    # odd nb: last chunk has one no-op step
    has_partial = (m_rows % br) != 0
    rows_last = m_rows - (nb - 1) * br
    sub = _pick_subrows(br)

    kernel = functools.partial(
        _dice_kernel, nbk=nbk, nb=nb, br=br, sub=sub, rows_last=rows_last,
        has_dummy=bool(has_dummy), has_partial=bool(has_partial))

    def block_map(c, k):
        # Dummy steps clamp to the last real block (their accumulate is skipped).
        return (jnp.minimum(c * nbk + k, nb - 1), 0)

    parts = pl.pallas_call(
        kernel,
        out_shape=jax.ShapeDtypeStruct((num_chunks, 3, _SUB, _LANE), jnp.float32),
        grid_spec=pltpu.PrefetchScalarGridSpec(
            num_scalar_prefetch=0,
            grid=(num_chunks, nbk),
            in_specs=[pl.BlockSpec((br, _LANE), block_map),
                      pl.BlockSpec((br, _LANE), block_map)],
            out_specs=pl.BlockSpec((1, 3, _SUB, _LANE),
                                   lambda c, k: (c, 0, 0, 0)),
            scratch_shapes=[pltpu.VMEM((_SUB, _LANE), jnp.float32)] * 3,
        ),
        compiler_params=pltpu.CompilerParams(
            dimension_semantics=("parallel", "arbitrary"),
            vmem_limit_bytes=48 * 1024 * 1024),
    )(p2, t2)

    sums = jnp.sum(parts, axis=(0, 2, 3), dtype=jnp.float32)   # (3,)
    return sums[0], sums[1], sums[2]


def dice_loss_pdbev(pred, target, *, eps=1e-6, reduction="mean",
                    loss_weight=1.0, block_rows=8192):
    """JAX/Pallas equivalent of DiceLoss_PDBEV.forward (weight/avg_factor=None)."""
    assert reduction in ("none", "mean", "sum")
    # TODO(synk): elementwise `weight` / `avg_factor` of @weighted_loss are not
    # supported (the reference module's forward always passes None for both).
    if jnp.issubdtype(target.dtype, jnp.signedinteger):
        assert jnp.iinfo(target.dtype).bits >= 16, (
            "signed int8 target cannot represent ignore_index=255 exactly")

    total = pred.size                    # N * H * W
    flat_p = pred.reshape(-1)            # free reshapes, native dtypes kept
    flat_t = target.reshape(-1)

    total_main = (total // _LANE) * _LANE
    tail = total - total_main

    a = jnp.float32(0.0)
    b = jnp.float32(0.0)
    c = jnp.float32(0.0)

    if total_main > 0:
        a, b, c = _dice_partial_sums(flat_p, flat_t, total_main,
                                     block_rows=block_rows)

    if tail > 0:                         # <128 ragged elements, plain JAX
        tp = flat_p[total_main:].astype(jnp.float32)
        tt = flat_t[total_main:].astype(jnp.float32)
        keep = tt != _IGNORE
        tp = jnp.where(keep, tp, 0.0)
        tt = jnp.where(keep, tt, 0.0)
        a = a + jnp.sum(tp * tt)
        b = b + jnp.sum(tp * tp)
        c = c + jnp.sum(tt * tt)

    b = b + jnp.float32(eps)
    c = c + jnp.float32(eps)
    loss = jnp.float32(loss_weight) * (1.0 - 2.0 * a / (b + c))
    if reduction == "none":
        return loss.reshape(1)   # masked dice collapses to a single element
    return loss                  # 'mean'/'sum' over one element == identity


def _reference(pred, target, *, eps=1e-6, loss_weight=1.0):
    p = pred.reshape(-1).astype(jnp.float32)
    t = target.reshape(-1).astype(jnp.float32)
    valid = (t != _IGNORE).astype(jnp.float32)
    p = p * valid
    t = t * valid
    a = jnp.sum(p * t)
    b = jnp.sum(p * p) + eps
    c = jnp.sum(t * t) + eps
    return loss_weight * (1.0 - 2.0 * a / (b + c))


if __name__ == "__main__":
    # Case 1: module-consistent small shape (N, H, W) = (2, 16, 16), f32.
    k1, k2, k3 = jax.random.split(jax.random.PRNGKey(0), 3)
    N, H, W = 2, 16, 16
    pred1 = jax.nn.sigmoid(jax.random.normal(k1, (N, H, W), dtype=jnp.float32))
    bin1 = (jax.random.uniform(k2, (N, H, W)) > 0.5).astype(jnp.float32)
    tgt1 = jnp.where(jax.random.uniform(k3, (N, H, W)) < 0.1,
                     jnp.float32(_IGNORE), bin1)
    loss1 = jax.block_until_ready(
        dice_loss_pdbev(pred1, tgt1, eps=1e-6, reduction="mean", loss_weight=1.0))
    ref1 = _reference(pred1, tgt1, eps=1e-6, loss_weight=1.0)
    assert jnp.allclose(loss1, ref1, rtol=1e-5, atol=1e-5), (loss1, ref1)

    # Case 2: odd shape -> in-kernel partial last block + <128 ragged tail.
    k4, k5, k6 = jax.random.split(jax.random.PRNGKey(1), 3)
    N2, H2, W2 = 3, 37, 53
    pred2 = jax.nn.sigmoid(jax.random.normal(k4, (N2, H2, W2), jnp.float32))
    bin2 = (jax.random.uniform(k5, (N2, H2, W2)) > 0.5).astype(jnp.float32)
    tgt2 = jnp.where(jax.random.uniform(k6, (N2, H2, W2)) < 0.1,
                     jnp.float32(_IGNORE), bin2)
    loss2 = jax.block_until_ready(dice_loss_pdbev(pred2, tgt2))
    ref2 = _reference(pred2, tgt2)
    assert jnp.allclose(loss2, ref2, rtol=1e-5, atol=1e-5), (loss2, ref2)

    # Case 3: narrow native dtypes (bf16 pred, uint8 target) + multi-block grid
    # with an odd block count (exercises the 2-chunk split + dummy step).
    k7, k8, k9 = jax.random.split(jax.random.PRNGKey(2), 3)
    N3, H3, W3 = 4, 64, 96
    pred3 = jax.nn.sigmoid(
        jax.random.normal(k7, (N3, H3, W3), jnp.float32)).astype(jnp.bfloat16)
    bin3 = (jax.random.uniform(k8, (N3, H3, W3)) > 0.5).astype(jnp.uint8)
    tgt3 = jnp.where(jax.random.uniform(k9, (N3, H3, W3)) < 0.1,
                     jnp.uint8(255), bin3).astype(jnp.uint8)
    loss3 = jax.block_until_ready(dice_loss_pdbev(pred3, tgt3, block_rows=64))
    ref3 = _reference(pred3, tgt3)
    assert jnp.allclose(loss3, ref3, rtol=1e-4, atol=1e-4), (loss3, ref3)

    print("KERNEL_OK")
</pallas_src>

<mosaic_0001>
module attributes {stable_mosaic.version = 11 : i64} {
  func.func @_dice_kernel(%arg0: i32, %arg1: i32, %arg2: memref<4x128xf32, #tpu.memory_space<vmem>>, %arg3: memref<4x128xf32, #tpu.memory_space<vmem>>, %arg4: memref<1x3x8x128xf32, #tpu.memory_space<vmem>>, %arg5: memref<8x128xf32, #tpu.memory_space<vmem>>, %arg6: memref<8x128xf32, #tpu.memory_space<vmem>>, %arg7: memref<8x128xf32, #tpu.memory_space<vmem>>) attributes {dimension_semantics = [#tpu.dimension_semantics<parallel>, #tpu.dimension_semantics<arbitrary>], iteration_bounds = array<i64: 1, 1>, scalar_prefetch = 0 : i64, scratch_operands = 3 : i64, tpu.core_type = #tpu.core_type<tc>, window_params = [{transform_indices = @transform_0, window_bounds = array<i64: 4, 128>}, {transform_indices = @transform_1, window_bounds = array<i64: 4, 128>}, {transform_indices = @transform_2, window_bounds = array<i64: 1, 3, 8, 128>}]} {
    %c0_i32 = arith.constant 0 : i32
    %0 = arith.cmpi eq, %arg1, %c0_i32 : i32
    %1 = arith.extui %0 : i1 to i32
    %c0_i32_0 = arith.constant 0 : i32
    %2 = arith.cmpi ne, %1, %c0_i32_0 : i32
    scf.if %2 {
      %cst_24 = arith.constant 0.000000e+00 : f32
      %38 = vector.broadcast %cst_24 : f32 to vector<8x128xf32>
      %c0_25 = arith.constant 0 : index
      %c0_26 = arith.constant 0 : index
      %39 = vector.load %arg5[%c0_25, %c0_26] : memref<8x128xf32, #tpu.memory_space<vmem>>, vector<8x128xf32>
      tpu.vector_store %arg5[%c0_25, %c0_26], %38 {strides = array<i32>} : memref<8x128xf32, #tpu.memory_space<vmem>>, vector<8x128xf32>,
      %cst_27 = arith.constant 0.000000e+00 : f32
      %40 = vector.broadcast %cst_27 : f32 to vector<8x128xf32>
      %c0_28 = arith.constant 0 : index
      %c0_29 = arith.constant 0 : index
      %41 = vector.load %arg6[%c0_28, %c0_29] : memref<8x128xf32, #tpu.memory_space<vmem>>, vector<8x128xf32>
      tpu.vector_store %arg6[%c0_28, %c0_29], %40 {strides = array<i32>} : memref<8x128xf32, #tpu.memory_space<vmem>>, vector<8x128xf32>,
      %cst_30 = arith.constant 0.000000e+00 : f32
      %42 = vector.broadcast %cst_30 : f32 to vector<8x128xf32>
      %c0_31 = arith.constant 0 : index
      %c0_32 = arith.constant 0 : index
      %43 = vector.load %arg7[%c0_31, %c0_32] : memref<8x128xf32, #tpu.memory_space<vmem>>, vector<8x128xf32>
      tpu.vector_store %arg7[%c0_31, %c0_32], %42 {strides = array<i32>} : memref<8x128xf32, #tpu.memory_space<vmem>>, vector<8x128xf32>,
    } else {
    }
    %c0_i32_1 = arith.constant 0 : i32
    %c1_i32 = arith.constant 1 : i32
    %3 = arith.muli %c0_i32_1, %c1_i32 : i32
    %c0_i32_2 = arith.constant 0 : i32
    %4 = arith.addi %c0_i32_2, %3 : i32
    %c4_i32 = arith.constant 4 : i32
    %5 = arith.muli %4, %c4_i32 : i32
    %6 = tpu.assume_multiple %5, 4 : i32
    %7 = arith.index_cast %6 : i32 to index
    %c0 = arith.constant 0 : index
    %8 = vector.load %arg2[%7, %c0] : memref<4x128xf32, #tpu.memory_space<vmem>>, vector<4x128xf32>
    %9 = arith.index_cast %6 : i32 to index
    %c0_3 = arith.constant 0 : index
    %10 = vector.load %arg3[%9, %c0_3] : memref<4x128xf32, #tpu.memory_space<vmem>>, vector<4x128xf32>
    %cst = arith.constant 2.550000e+02 : f32
    %11 = vector.broadcast %cst : f32 to vector<4x128xf32>
    %12 = arith.cmpf one, %10, %11 : vector<4x128xf32>
    %cst_4 = arith.constant 0.000000e+00 : f32
    %13 = vector.broadcast %cst_4 : f32 to vector<4x128xf32>
    %14 = arith.select %12, %8, %13 : vector<4x128xi1>, vector<4x128xf32>
    %cst_5 = arith.constant 0.000000e+00 : f32
    %15 = vector.broadcast %cst_5 : f32 to vector<4x128xf32>
    %16 = arith.select %12, %10, %15 : vector<4x128xi1>, vector<4x128xf32>
    %c0_6 = arith.constant 0 : index
    %c0_7 = arith.constant 0 : index
    %17 = vector.load %arg5[%c0_6, %c0_7] : memref<8x128xf32, #tpu.memory_space<vmem>>, vector<1x128xf32>
    %18 = arith.mulf %14, %16 : vector<4x128xf32>
    %cst_8 = arith.constant dense<0.000000e+00> : vector<128xf32>
    %19 = vector.multi_reduction <add>, %18, %cst_8 [0] : vector<4x128xf32> to vector<128xf32>
    %20 = vector.shape_cast %19 : vector<128xf32> to vector<1x128xf32>
    %21 = arith.addf %17, %20 : vector<1x128xf32>
    %c0_9 = arith.constant 0 : index
    %c0_10 = arith.constant 0 : index
    %22 = vector.load %arg5[%c0_9, %c0_10] : memref<8x128xf32, #tpu.memory_space<vmem>>, vector<1x128xf32>
    tpu.vector_store %arg5[%c0_9, %c0_10], %21 {strides = array<i32>} : memref<8x128xf32, #tpu.memory_space<vmem>>, vector<1x128xf32>,
    %c0_11 = arith.constant 0 : index
    %c0_12 = arith.constant 0 : index
    %23 = vector.load %arg6[%c0_11, %c0_12] : memref<8x128xf32, #tpu.memory_space<vmem>>, vector<1x128xf32>
    %24 = arith.mulf %14, %14 : vector<4x128xf32>
    %cst_13 = arith.constant dense<0.000000e+00> : vector<128xf32>
    %25 = vector.multi_reduction <add>, %24, %cst_13 [0] : vector<4x128xf32> to vector<128xf32>
    %26 = vector.shape_cast %25 : vector<128xf32> to vector<1x128xf32>
    %27 = arith.addf %23, %26 : vector<1x128xf32>
    %c0_14 = arith.constant 0 : index
    %c0_15 = arith.constant 0 : index
    %28 = vector.load %arg6[%c0_14, %c0_15] : memref<8x128xf32, #tpu.memory_space<vmem>>, vector<1x128xf32>
    tpu.vector_store %arg6[%c0_14, %c0_15], %27 {strides = array<i32>} : memref<8x128xf32, #tpu.memory_space<vmem>>, vector<1x128xf32>,
    %c0_16 = arith.constant 0 : index
    %c0_17 = arith.constant 0 : index
    %29 = vector.load %arg7[%c0_16, %c0_17] : memref<8x128xf32, #tpu.memory_space<vmem>>, vector<1x128xf32>
    %30 = arith.mulf %16, %16 : vector<4x128xf32>
    %cst_18 = arith.constant dense<0.000000e+00> : vector<128xf32>
    %31 = vector.multi_reduction <add>, %30, %cst_18 [0] : vector<4x128xf32> to vector<128xf32>
    %32 = vector.shape_cast %31 : vector<128xf32> to vector<1x128xf32>
    %33 = arith.addf %29, %32 : vector<1x128xf32>
    %c0_19 = arith.constant 0 : index
    %c0_20 = arith.constant 0 : index
    %34 = vector.load %arg7[%c0_19, %c0_20] : memref<8x128xf32, #tpu.memory_space<vmem>>, vector<1x128xf32>
    tpu.vector_store %arg7[%c0_19, %c0_20], %33 {strides = array<i32>} : memref<8x128xf32, #tpu.memory_space<vmem>>, vector<1x128xf32>,
    %c1_i32_21 = arith.constant 1 : i32
    %c0_i32_22 = arith.constant 0 : i32
    %35 = arith.cmpi eq, %arg1, %c0_i32_22 : i32
    %36 = arith.extui %35 : i1 to i32
    %c0_i32_23 = arith.constant 0 : i32
    %37 = arith.cmpi ne, %36, %c0_i32_23 : i32
    scf.if %37 {
      %c0_24 = arith.constant 0 : index
      %c0_25 = arith.constant 0 : index
      %38 = vector.load %arg5[%c0_24, %c0_25] : memref<8x128xf32, #tpu.memory_space<vmem>>, vector<8x128xf32>
      %c0_26 = arith.constant 0 : index
      %c0_27 = arith.constant 0 : index
      %c0_28 = arith.constant 0 : index
      %c0_29 = arith.constant 0 : index
      %39 = vector.load %arg4[%c0_26, %c0_27, %c0_28, %c0_29] : memref<1x3x8x128xf32, #tpu.memory_space<vmem>>, vector<1x1x8x128xf32>
      %40 = vector.shape_cast %39 : vector<1x1x8x128xf32> to vector<8x128xf32>
      %41 = vector.shape_cast %38 : vector<8x128xf32> to vector<1x1x8x128xf32>
      tpu.vector_store %arg4[%c0_26, %c0_27, %c0_28, %c0_29], %41 {strides = array<i32>} : memref<1x3x8x128xf32, #tpu.memory_space<vmem>>, vector<1x1x8x128xf32>,
      %c0_30 = arith.constant 0 : index
      %c0_31 = arith.constant 0 : index
      %42 = vector.load %arg6[%c0_30, %c0_31] : memref<8x128xf32, #tpu.memory_space<vmem>>, vector<8x128xf32>
      %c0_32 = arith.constant 0 : index
      %c1 = arith.constant 1 : index
      %c0_33 = arith.constant 0 : index
      %c0_34 = arith.constant 0 : index
      %43 = vector.load %arg4[%c0_32, %c1, %c0_33, %c0_34] : memref<1x3x8x128xf32, #tpu.memory_space<vmem>>, vector<1x1x8x128xf32>
      %44 = vector.shape_cast %43 : vector<1x1x8x128xf32> to vector<8x128xf32>
      %45 = vector.shape_cast %42 : vector<8x128xf32> to vector<1x1x8x128xf32>
      tpu.vector_store %arg4[%c0_32, %c1, %c0_33, %c0_34], %45 {strides = array<i32>} : memref<1x3x8x128xf32, #tpu.memory_space<vmem>>, vector<1x1x8x128xf32>,
      %c0_35 = arith.constant 0 : index
      %c0_36 = arith.constant 0 : index
      %46 = vector.load %arg7[%c0_35, %c0_36] : memref<8x128xf32, #tpu.memory_space<vmem>>, vector<8x128xf32>
      %c0_37 = arith.constant 0 : index
      %c2 = arith.constant 2 : index
      %c0_38 = arith.constant 0 : index
      %c0_39 = arith.constant 0 : index
      %47 = vector.load %arg4[%c0_37, %c2, %c0_38, %c0_39] : memref<1x3x8x128xf32, #tpu.memory_space<vmem>>, vector<1x1x8x128xf32>
      %48 = vector.shape_cast %47 : vector<1x1x8x128xf32> to vector<8x128xf32>
      %49 = vector.shape_cast %46 : vector<8x128xf32> to vector<1x1x8x128xf32>
      tpu.vector_store %arg4[%c0_37, %c2, %c0_38, %c0_39], %49 {strides = array<i32>} : memref<1x3x8x128xf32, #tpu.memory_space<vmem>>, vector<1x1x8x128xf32>,
    } else {
    }
    return
  }
  func.func @transform_0(%arg0: i32, %arg1: i32) -> (i32, i32) {
    %c1_i32 = arith.constant 1 : i32
    %0 = arith.muli %arg0, %c1_i32 : i32
    %1 = arith.addi %0, %arg1 : i32
    %c0_i32 = arith.constant 0 : i32
    %2 = arith.minsi %1, %c0_i32 : i32
    %c0_i32_0 = arith.constant 0 : i32
    %c0_i32_1 = arith.constant 0 : i32
    return %2, %c0_i32_0 : i32, i32
  }
  func.func @transform_1(%arg0: i32, %arg1: i32) -> (i32, i32) {
    %c1_i32 = arith.constant 1 : i32
    %0 = arith.muli %arg0, %c1_i32 : i32
    %1 = arith.addi %0, %arg1 : i32
    %c0_i32 = arith.constant 0 : i32
    %2 = arith.minsi %1, %c0_i32 : i32
    %c0_i32_0 = arith.constant 0 : i32
    %c0_i32_1 = arith.constant 0 : i32
    return %2, %c0_i32_0 : i32, i32
  }
  func.func @transform_2(%arg0: i32, %arg1: i32) -> (i32, i32, i32, i32) {
    %c0_i32 = arith.constant 0 : i32
    %c0_i32_0 = arith.constant 0 : i32
    %c0_i32_1 = arith.constant 0 : i32
    %c0_i32_2 = arith.constant 0 : i32
    return %arg0, %c0_i32, %c0_i32_0, %c0_i32_1 : i32, i32, i32, i32
  }
}

</mosaic_0001>

<llo_original>
// kernel: tpu_custom_call.1
$region0: #{tpu_custom_call.1}
  #allocation0 [shape = 'u32[]', space=smem, size = 0x4, offset = 0x4, fixed_abs, tag = 'smem constant byte address 0x4 - core index']
  #allocation1 [shape = 'u32[144,128]{1,0:T(1,128)}', space=vmem, size = 0x12000, scoped, tag = 'internal scratch']
  #allocation2 [shape = 'f32[8,128]{1,0:T(8,128)}', space=vmem, size = 0x1000, scoped, tag = 'scratch operand']
  #allocation3 [shape = 'f32[8,128]{1,0:T(8,128)}', space=vmem, size = 0x1000, scoped, tag = 'scratch operand']
  #allocation4 [shape = 'f32[8,128]{1,0:T(8,128)}', space=vmem, size = 0x1000, scoped, tag = 'scratch operand']
  %s0 = inlined_call_operand.hbm [shape: f32[4,128], index: 0, kind: input, shape index: {}]
  %s1 = inlined_call_operand.hbm [shape: f32[4,128], index: 1, kind: input, shape index: {}]
  %s2 = inlined_call_operand.hbm [shape: f32[1,3,8,128], index: 2, kind: output, shape index: {}]
  %s3 = sld [smem:[#allocation0]]
  $region34: #{tpu_custom_call.1} parent=0
    _
  %s5 = ssub.s32 1, %s3
  %s6 = scalar_select 0, %s5, %s3
  $region1: #{tpu_custom_call.1} parent=0
    #allocation5 [shape = 'u8[2048]{0}', space=vmem, size = 0x800, scoped, tag = 'input window, operand 0, single buffered']
    #allocation6 [shape = 's32[1]{0}', space=sflag, size = 0x4, scoped, tag = 'scoped memory for tpu_custom_call.1']
    #allocation7 [shape = 's32[1]{0}', space=sflag, size = 0x4, scoped, tag = 'scoped memory for tpu_custom_call.1']
    #allocation8 [shape = 'u8[2048]{0}', space=vmem, size = 0x800, scoped, tag = 'input window, operand 1, single buffered']
    #allocation9 [shape = 's32[1]{0}', space=sflag, size = 0x4, scoped, tag = 'scoped memory for tpu_custom_call.1']
    #allocation10 [shape = 'u8[12288]{0}', space=vmem, size = 0x3000, scoped, tag = 'output window, operand 0, single buffered']
    %7 = vsyncpa [#allocation6], 0
    %8 = vsyncpa [#allocation9], 0
    %9 = vsyncpa [#allocation7], 0
    // Predicated region
    $region2: #{tpu_custom_call.1} parent=1 // pred_check
      _
    $region3: #{tpu_custom_call.1} parent=1 // pred_check_branch
      %11 = sbr.rel (0) target = $region5
    $region4: #{tpu_custom_call.1} parent=1 // pred_region
      %s12 = sadd.s32 0, 0
      %p13 = scmp.lt.s32.totalorder %s12, 0
      %s14 = scalar_select %p13, %s12, 0
      %s16 = ssub.s32 64, 64
      %17 = vsyncadd [#allocation6], %s16
      %s18 = smul.addr %s14, 64
      %s19 = scalar_lea.hbm %s0, %s18
      %s21 = sshll.u32 [#allocation5], 4
      %s22 = int_to_ptr.vmem [resolvable:$true] %s21
      %24 = dma.hbm_to_vmem [thread:$0]  %s19, 64, %s22, [#allocation6]
    $region5: #{tpu_custom_call.1} parent=1 // pred_fallthru
      _
    // Predicated region
    $region6: #{tpu_custom_call.1} parent=1 // pred_check
      _
    $region7: #{tpu_custom_call.1} parent=1 // pred_check_branch
      %26 = sbr.rel (0) target = $region9
    $region8: #{tpu_custom_call.1} parent=1 // pred_region
      %s27 = sadd.s32 0, 0
      %p28 = scmp.lt.s32.totalorder %s27, 0
      %s29 = scalar_select %p28, %s27, 0
      %s31 = ssub.s32 64, 64
      %32 = vsyncadd [#allocation9], %s31
      %s33 = smul.addr %s29, 64
      %s34 = scalar_lea.hbm %s1, %s33
      %s36 = sshll.u32 [#allocation8], 4
      %s37 = int_to_ptr.vmem [resolvable:$true] %s36
      %39 = dma.hbm_to_vmem [thread:$0]  %s34, 64, %s37, [#allocation9]
    $region9: #{tpu_custom_call.1} parent=1 // pred_fallthru
      _
    // Predicated region
    $region10: #{tpu_custom_call.1} parent=1 // pred_check
      _
    $region11: #{tpu_custom_call.1} parent=1 // pred_check_branch
      %41 = sbr.rel (0) target = $region13
    $region12: #{tpu_custom_call.1} parent=1 // pred_region
      %42 = dma.done [#allocation6], 64
    $region13: #{tpu_custom_call.1} parent=1 // pred_fallthru
      _
    // Predicated region
    $region14: #{tpu_custom_call.1} parent=1 // pred_check
      _
    $region15: #{tpu_custom_call.1} parent=1 // pred_check_branch
      %44 = sbr.rel (0) target = $region17
    $region16: #{tpu_custom_call.1} parent=1 // pred_region
      %45 = dma.done [#allocation9], 64
    $region17: #{tpu_custom_call.1} parent=1 // pred_fallthru
      _
    %s46 = sadd.s32 0, 0
    %p47 = scmp.lt.s32.totalorder %s46, 0
    %s48 = scalar_select %p47, %s46, 0
    %s49 = sadd.s32 0, 0
    %p50 = scmp.lt.s32.totalorder %s49, 0
    %s51 = scalar_select %p50, %s49, 0
    %p52 = scmp.eq.s32.totalorder 0, 0
    // Predicated region
    $region18: #{tpu_custom_call.1} parent=1 // pred_check
      %p53 = pneg %p52
    $region19: #{tpu_custom_call.1} parent=1 // pred_check_branch
      %55 = sbr.rel (%p53) target = $region21
    $region20: #{tpu_custom_call.1} parent=1 // pred_region
      %56 = vst [vmem:[#allocation2] sm:$0xff] 0.0
      %57 = vst [vmem:[#allocation3] sm:$0xff] 0.0
      %58 = vst [vmem:[#allocation4] sm:$0xff] 0.0
    $region21: #{tpu_custom_call.1} parent=1 // pred_fallthru
      _
    %v59 = vld [vmem:[#allocation5] sm:$0xf]
    %v60 = vld [vmem:[#allocation8] sm:$0xf]
    %vm61 = vcmp.ne.f32.partialorder %v60, 255.0
    %v62 = vsel %vm61, %v59, 0.0
    %v63 = vsel %vm61, %v60, 0.0
    %v64 = vld [vmem:[#allocation2] sm:$0x1]
    %v65 = vmul.f32 %v62, %v63
    %vm66 = vcmask 1043456
    %v67 = vsel %vm66, %v65, 0.0
    %v68 = vrot.slane %v67, 4
    %v69 = vadd.f32 %v67, %v68
    %v70 = vrot.slane %v69, 2
    %v71 = vadd.f32 %v69, %v70
    %v72 = vrot.slane %v71, 1
    %v73 = vadd.f32 %v71, %v72
    %v74 = vadd.f32 %v64, %v73
    %75 = vst [vmem:[#allocation2] sm:$0x1] %v74
    %v76 = vld [vmem:[#allocation3] sm:$0x1]
    %v77 = vmul.f32 %v62, %v62
    %v78 = vsel %vm66, %v77, 0.0
    %v79 = vrot.slane %v78, 4
    %v80 = vadd.f32 %v78, %v79
    %v81 = vrot.slane %v80, 2
    %v82 = vadd.f32 %v80, %v81
    %v83 = vrot.slane %v82, 1
    %v84 = vadd.f32 %v82, %v83
    %v85 = vadd.f32 %v76, %v84
    %86 = vst [vmem:[#allocation3] sm:$0x1] %v85
    %v87 = vld [vmem:[#allocation4] sm:$0x1]
    %v88 = vmul.f32 %v63, %v63
    %v89 = vsel %vm66, %v88, 0.0
    %v90 = vrot.slane %v89, 4
    %v91 = vadd.f32 %v89, %v90
    %v92 = vrot.slane %v91, 2
    %v93 = vadd.f32 %v91, %v92
    %v94 = vrot.slane %v93, 1
    %v95 = vadd.f32 %v93, %v94
    %v96 = vadd.f32 %v87, %v95
    %97 = vst [vmem:[#allocation4] sm:$0x1] %v96
    // Predicated region
    $region22: #{tpu_custom_call.1} parent=1 // pred_check
      %p98 = pneg %p52
    $region23: #{tpu_custom_call.1} parent=1 // pred_check_branch
      %100 = sbr.rel (%p98) target = $region25
    $region24: #{tpu_custom_call.1} parent=1 // pred_region
      %v101 = vld [vmem:[#allocation2] sm:$0xff]
      %102 = vst [vmem:[#allocation10] sm:$0xff] %v101
      %v103 = vld [vmem:[#allocation3] sm:$0xff]
      %s104 = scalar_lea.vmem [#allocation10], 8
      %105 = vst [vmem:[%s104] sm:$0xff] %v103
      %v106 = vld [vmem:[#allocation4] sm:$0xff]
      %s107 = scalar_lea.vmem [#allocation10], 16
      %108 = vst [vmem:[%s107] sm:$0xff] %v106
    $region25: #{tpu_custom_call.1} parent=1 // pred_fallthru
      _
    // Predicated region
    $region26: #{tpu_custom_call.1} parent=1 // pred_check
      _
    $region27: #{tpu_custom_call.1} parent=1 // pred_check_branch
      %110 = sbr.rel (0) target = $region29
    $region28: #{tpu_custom_call.1} parent=1 // pred_region
      %s112 = ssub.s32 384, 384
      %113 = vsyncadd [#allocation7], %s112
      %s114 = sshll.u32 [#allocation10], 4
      %s115 = int_to_ptr.vmem [resolvable:$true] %s114
      %120 = dma.vmem_to_hbm [thread:$0]  %s115, 384, %s2, [#allocation7], 128, 128, 8
    $region29: #{tpu_custom_call.1} parent=1 // pred_fallthru
      _
    // Predicated region
    $region30: #{tpu_custom_call.1} parent=1 // pred_check
      _
    $region31: #{tpu_custom_call.1} parent=1 // pred_check_branch
      %122 = sbr.rel (0) target = $region33
    $region32: #{tpu_custom_call.1} parent=1 // pred_region
      %123 = dma.done [#allocation7], 384
    $region33: #{tpu_custom_call.1} parent=1 // pred_fallthru
      _
    %124 = vsyncpa [#allocation6], 1
    %125 = vsyncpa [#allocation9], 1
    %126 = vsyncpa [#allocation7], 1

</llo_original>
